<compile_context>
chip_gen: v6e
topology: v6e:2x2x1
jax: 0.10.0
libtpu: 0.0.40
codegen_flags: <defaults>
</compile_context>

<pallas_src>
import functools

import jax
import jax.numpy as jnp
from jax import lax
from jax.experimental import pallas as pl
from jax.experimental.pallas import tpu as pltpu


def _round_up(x, m):
    return ((x + m - 1) // m) * m


# ----------------------------------------------------------------------------
# Kernel: fused n-stack autoencoder forward on one batch tile.
# ----------------------------------------------------------------------------
def _fused_stack_kernel(x_ref, w1_ref, b1_ref, w2_ref, b2_ref, o_ref, *, n):
    """out = stack_{n-1}( ... stack_0(x) ... ), with
       stack_i(x) = relu(x @ W1[i] + b1[i]) @ W2[i] + b2[i].

    Activation stays vreg/VMEM resident across all n stacks; weights are bf16
    MXU operands with f32 accumulation; bias add / ReLU stay f32 on the VPU.
    """
    compute_dtype = w1_ref.dtype  # bf16 (or f32 if packed that way)

    def one_stack(i, x):
        h = jnp.dot(x.astype(compute_dtype), w1_ref[i],
                    preferred_element_type=jnp.float32)      # (tb, Hp) f32
        h = jnp.maximum(h + b1_ref[i], 0.0)                   # bias + ReLU
        y = jnp.dot(h.astype(compute_dtype), w2_ref[i],
                    preferred_element_type=jnp.float32)       # (tb, Dp) f32
        return y + b2_ref[i]

    x = x_ref[...].astype(jnp.float32)
    if n <= 8:
        for i in range(n):                                    # static unroll
            x = one_stack(i, x)
    else:
        # Many stacks: keep one iteration's live set (dynamic ref indexing).
        x = lax.fori_loop(0, n, one_stack, x)
    o_ref[...] = x.astype(o_ref.dtype)


# ----------------------------------------------------------------------------
# Wrapper: single pallas_call for the whole stacked forward.
# ----------------------------------------------------------------------------
def stacked_autoencoder_forward(x, packed_params, n, *, tile_b=512):
    """Equivalent of StackedAutoEncoder.forward(x, n).

    packed_params = (w1_all, b1_all, w2_all, b2_all) from pack_params():
      w1_all: (N, Dp, Hp) bf16   b1_all: (N, 1, Hp) f32
      w2_all: (N, Hp, Dp) bf16   b2_all: (N, 1, Dp) f32
    """
    w1_all, b1_all, w2_all, b2_all = packed_params
    B, D = x.shape
    N, Dp, Hp = w1_all.shape
    assert 0 < n <= N, f"n={n} out of range for {N} stacks"
    assert D <= Dp

    # Only move the n stacks actually used (static slice -> less HBM traffic).
    w1, b1, w2, b2 = w1_all[:n], b1_all[:n], w2_all[:n], b2_all[:n]

    # Batch tiling: one tile for small B (splitting tiny work is overhead);
    # otherwise >= 2 "parallel" grid steps (pipelining + v7x megacore),
    # capped at tile_b and aligned to the sublane granule of 8.
    if B <= 128:
        tb = B
    else:
        tb = min(tile_b, _round_up((B + 1) // 2, 8))
    Bp = _round_up(B, tb)
    n_steps = Bp // tb

    # Lane-dense feature dim: pad x to (Bp, Dp); weights were packed with zero
    # rows/cols so the math is unchanged, output sliced back below.
    xp = x
    if Bp != B or Dp != D:
        xp = jnp.pad(x, ((0, Bp - B), (0, Dp - D)))

    # Weight/bias blocks: full (sliced) arrays, same block every grid step.
    # When the grid has >1 step, single-buffer them (their index never changes,
    # so double-buffering only wastes VMEM — matters on v7x's 64 MiB).
    w_kw = dict(pipeline_mode=pl.Buffered(1)) if n_steps > 1 else {}
    w_specs = [
        pl.BlockSpec((n, Dp, Hp), lambda i: (0, 0, 0), **w_kw),
        pl.BlockSpec((n, 1, Hp), lambda i: (0, 0, 0), **w_kw),
        pl.BlockSpec((n, Hp, Dp), lambda i: (0, 0, 0), **w_kw),
        pl.BlockSpec((n, 1, Dp), lambda i: (0, 0, 0), **w_kw),
    ]

    # Explicit VMEM limit only when the footprint exceeds the default scoped
    # cap (keeps the demo path identical to the already-clean configuration).
    wbytes = jnp.dtype(w1.dtype).itemsize
    est = (2 * 2 * tb * Dp * 4                       # x + out tiles, 2x bufs, f32
           + 2 * n * 2 * Hp * Dp * wbytes            # W1 + W2 (worst case 2x bufs)
           + 2 * n * (Hp + Dp) * 4                   # biases, f32
           + (2 << 20))                              # slack
    vmem_limit = int(min(est, 64 << 20)) if est > (32 << 20) else None

    kernel = functools.partial(_fused_stack_kernel, n=n)

    out = pl.pallas_call(
        kernel,
        out_shape=jax.ShapeDtypeStruct((Bp, Dp), jnp.float32),
        grid_spec=pltpu.PrefetchScalarGridSpec(
            num_scalar_prefetch=0,
            grid=(n_steps,),
            in_specs=[pl.BlockSpec((tb, Dp), lambda i: (i, 0))] + w_specs,
            out_specs=pl.BlockSpec((tb, Dp), lambda i: (i, 0)),
        ),
        compiler_params=pltpu.CompilerParams(
            dimension_semantics=("parallel",),
            vmem_limit_bytes=vmem_limit),
    )(xp, w1, b1, w2, b2)

    return out[:B, :D]


# ----------------------------------------------------------------------------
# Parameter init (PyTorch Linear layout) + one-time packing for the kernel.
# ----------------------------------------------------------------------------
def init_stacked_autoencoder_params(key, input_dim, hidden_dim, output_dim,
                                     num_stacks):
    """PyTorch-style init; weights kept in torch layout (out, in)."""
    params = []
    for _ in range(num_stacks):
        k1, k2, k3, k4, key = jax.random.split(key, 5)
        bound1 = 1.0 / jnp.sqrt(input_dim)
        bound2 = 1.0 / jnp.sqrt(hidden_dim)
        w1 = jax.random.uniform(k1, (hidden_dim, input_dim), jnp.float32,
                                -bound1, bound1)
        b1 = jax.random.uniform(k2, (hidden_dim,), jnp.float32, -bound1, bound1)
        w2 = jax.random.uniform(k3, (output_dim, hidden_dim), jnp.float32,
                                -bound2, bound2)
        b2 = jax.random.uniform(k4, (output_dim,), jnp.float32, -bound2, bound2)
        params.append((w1, b1, w2, b2))
    return params


def pack_params(params, *, weight_dtype=jnp.bfloat16, hidden_pad=8,
                feature_pad=128):
    """One-time transform:
      * transpose torch-layout (out, in) weights to (in, out),
      * zero-pad the feature dim D to a lane-dense multiple of 128
        (W1 rows, W2 cols, b2) -> unmasked lane-dense stores on the output,
      * zero-pad the hidden dim only to a sublane multiple of 8 (H is tiny;
        padding to 128 would inflate weight HBM bytes ~25x for no benefit),
      * cast weights to bf16 (in-kernel accumulation stays f32), biases f32,
      * stack all autoencoders along axis 0.
    Zero padding is mathematically neutral (relu(0)=0, zero rows/cols).
    """
    H, D_in = params[0][0].shape
    D_out = params[0][2].shape[0]
    assert D_in == D_out, "stacking requires input_dim == output_dim"
    D = D_in
    Hp = _round_up(H, hidden_pad)
    Dp = _round_up(D, feature_pad)
    w1s, b1s, w2s, b2s = [], [], [], []
    for (w1, b1, w2, b2) in params:
        w1_t = jnp.zeros((Dp, Hp), weight_dtype).at[:D, :H].set(
            w1.T.astype(weight_dtype))
        b1_p = jnp.zeros((1, Hp), jnp.float32).at[:, :H].set(b1[None, :])
        w2_t = jnp.zeros((Hp, Dp), weight_dtype).at[:H, :D].set(
            w2.T.astype(weight_dtype))
        b2_p = jnp.zeros((1, Dp), jnp.float32).at[:, :D].set(b2[None, :])
        w1s.append(w1_t); b1s.append(b1_p); w2s.append(w2_t); b2s.append(b2_p)
    return (jnp.stack(w1s), jnp.stack(b1s), jnp.stack(w2s), jnp.stack(b2s))


def _reference_forward(x, params, n, *, compute_dtype=jnp.bfloat16):
    """Pure-JAX reference mirroring the kernel's numerics: matmul operands
    rounded to compute_dtype, f32 accumulation, f32 bias / ReLU."""
    rd = lambda a: a.astype(compute_dtype).astype(jnp.float32)
    for i in range(n):
        w1, b1, w2, b2 = params[i]
        h = jnp.maximum(rd(x) @ rd(w1).T + b1, 0.0)
        x = rd(h) @ rd(w2).T + b2
    return x


if __name__ == "__main__":
    # Small shapes consistent with the module: num_jokes -> feature dim.
    NUM_JOKES = 64       # input_dim == output_dim == num_jokes
    HIDDEN_DIM = 5       # module default hidden_dim=5
    NUM_STACKS = 6       # module default num_stacks=6
    BATCH = 8
    N_APPLY = 3          # number of stacks applied in forward(x, n)

    key = jax.random.PRNGKey(0)
    kx, kp = jax.random.split(key)
    x = jax.random.normal(kx, (BATCH, NUM_JOKES), jnp.float32)
    params = init_stacked_autoencoder_params(
        kp, NUM_JOKES, HIDDEN_DIM, NUM_JOKES, NUM_STACKS)
    packed = pack_params(params)   # one-time: transpose + pad + bf16 + stack

    out = stacked_autoencoder_forward(x, packed, N_APPLY)
    out = jax.block_until_ready(out)

    ref = _reference_forward(x, params, N_APPLY)
    assert out.shape == (BATCH, NUM_JOKES)
    assert jnp.allclose(out, ref, atol=1e-4, rtol=1e-4), \
        float(jnp.max(jnp.abs(out - ref)))

    # TODO(synk): if D/Hp/N ever grow so 2x packed weights exceed the scoped
    # VMEM limit (first on v7x, 64 MiB), move to grid=(batch, stack) with the
    # stack axis "arbitrary", a VMEM-scratch activation carry, and per-stack
    # weight index_map lambda b, k: (k, 0, 0).
    print("KERNEL_OK")
</pallas_src>

<mosaic_0001>
module attributes {stable_mosaic.version = 11 : i64} {
  func.func @_fused_stack_kernel(%arg0: i32, %arg1: memref<8x128xf32, #tpu.memory_space<vmem>>, %arg2: memref<3x128x8xbf16, #tpu.memory_space<vmem>>, %arg3: memref<3x1x8xf32, #tpu.memory_space<vmem>>, %arg4: memref<3x8x128xbf16, #tpu.memory_space<vmem>>, %arg5: memref<3x1x128xf32, #tpu.memory_space<vmem>>, %arg6: memref<8x128xf32, #tpu.memory_space<vmem>>) attributes {dimension_semantics = [#tpu.dimension_semantics<parallel>], iteration_bounds = array<i64: 1>, scalar_prefetch = 0 : i64, scratch_operands = 0 : i64, tpu.core_type = #tpu.core_type<tc>, window_params = [{transform_indices = @transform_0, window_bounds = array<i64: 8, 128>}, {pipeline_mode = #tpu.pipeline_mode<synchronous>, transform_indices = @transform_1, window_bounds = array<i64: 3, 128, 8>}, {pipeline_mode = #tpu.pipeline_mode<synchronous>, transform_indices = @transform_2, window_bounds = array<i64: 3, 1, 8>}, {pipeline_mode = #tpu.pipeline_mode<synchronous>, transform_indices = @transform_3, window_bounds = array<i64: 3, 8, 128>}, {pipeline_mode = #tpu.pipeline_mode<synchronous>, transform_indices = @transform_4, window_bounds = array<i64: 3, 1, 128>}, {transform_indices = @transform_5, window_bounds = array<i64: 8, 128>}]} {
    %c0 = arith.constant 0 : index
    %c0_0 = arith.constant 0 : index
    %0 = vector.load %arg1[%c0, %c0_0] : memref<8x128xf32, #tpu.memory_space<vmem>>, vector<8x128xf32>
    %1 = arith.truncf %0 : vector<8x128xf32> to vector<8x128xbf16>
    %c0_1 = arith.constant 0 : index
    %c0_2 = arith.constant 0 : index
    %c0_3 = arith.constant 0 : index
    %2 = vector.load %arg2[%c0_1, %c0_2, %c0_3] : memref<3x128x8xbf16, #tpu.memory_space<vmem>>, vector<1x128x8xbf16>
    %3 = vector.shape_cast %2 : vector<1x128x8xbf16> to vector<128x8xbf16>
    %cst = arith.constant dense<0.000000e+00> : vector<8x8xf32>
    %4 = tpu.matmul %1, %3, %cst {dimension_numbers = #tpu.dot_dimension_numbers<[1], [0], [0], [1], [0, 0, 1, 1], [], []>} : vector<8x128xbf16>, vector<128x8xbf16>, vector<8x8xf32> -> vector<8x8xf32>
    %c0_4 = arith.constant 0 : index
    %c0_5 = arith.constant 0 : index
    %c0_6 = arith.constant 0 : index
    %5 = vector.load %arg3[%c0_4, %c0_5, %c0_6] : memref<3x1x8xf32, #tpu.memory_space<vmem>>, vector<1x1x8xf32>
    %6 = vector.shape_cast %5 : vector<1x1x8xf32> to vector<1x8xf32>
    %7 = vector.broadcast %6 : vector<1x8xf32> to vector<8x8xf32>
    %8 = arith.addf %4, %7 : vector<8x8xf32>
    %cst_7 = arith.constant 0.000000e+00 : f32
    %9 = vector.broadcast %cst_7 : f32 to vector<8x8xf32>
    %10 = arith.maximumf %8, %9 : vector<8x8xf32>
    %11 = arith.truncf %10 : vector<8x8xf32> to vector<8x8xbf16>
    %c0_8 = arith.constant 0 : index
    %c0_9 = arith.constant 0 : index
    %c0_10 = arith.constant 0 : index
    %12 = vector.load %arg4[%c0_8, %c0_9, %c0_10] : memref<3x8x128xbf16, #tpu.memory_space<vmem>>, vector<1x8x128xbf16>
    %13 = vector.shape_cast %12 : vector<1x8x128xbf16> to vector<8x128xbf16>
    %cst_11 = arith.constant dense<0.000000e+00> : vector<8x128xf32>
    %14 = tpu.matmul %11, %13, %cst_11 {dimension_numbers = #tpu.dot_dimension_numbers<[1], [0], [0], [1], [0, 0, 1, 1], [], []>} : vector<8x8xbf16>, vector<8x128xbf16>, vector<8x128xf32> -> vector<8x128xf32>
    %c0_12 = arith.constant 0 : index
    %c0_13 = arith.constant 0 : index
    %c0_14 = arith.constant 0 : index
    %15 = vector.load %arg5[%c0_12, %c0_13, %c0_14] : memref<3x1x128xf32, #tpu.memory_space<vmem>>, vector<1x1x128xf32>
    %16 = vector.shape_cast %15 : vector<1x1x128xf32> to vector<1x128xf32>
    %17 = vector.broadcast %16 : vector<1x128xf32> to vector<8x128xf32>
    %18 = arith.addf %14, %17 : vector<8x128xf32>
    %19 = arith.truncf %18 : vector<8x128xf32> to vector<8x128xbf16>
    %c1 = arith.constant 1 : index
    %c0_15 = arith.constant 0 : index
    %c0_16 = arith.constant 0 : index
    %20 = vector.load %arg2[%c1, %c0_15, %c0_16] : memref<3x128x8xbf16, #tpu.memory_space<vmem>>, vector<1x128x8xbf16>
    %21 = vector.shape_cast %20 : vector<1x128x8xbf16> to vector<128x8xbf16>
    %cst_17 = arith.constant dense<0.000000e+00> : vector<8x8xf32>
    %22 = tpu.matmul %19, %21, %cst_17 {dimension_numbers = #tpu.dot_dimension_numbers<[1], [0], [0], [1], [0, 0, 1, 1], [], []>} : vector<8x128xbf16>, vector<128x8xbf16>, vector<8x8xf32> -> vector<8x8xf32>
    %c1_18 = arith.constant 1 : index
    %c0_19 = arith.constant 0 : index
    %c0_20 = arith.constant 0 : index
    %23 = vector.load %arg3[%c1_18, %c0_19, %c0_20] : memref<3x1x8xf32, #tpu.memory_space<vmem>>, vector<1x1x8xf32>
    %24 = vector.shape_cast %23 : vector<1x1x8xf32> to vector<1x8xf32>
    %25 = vector.broadcast %24 : vector<1x8xf32> to vector<8x8xf32>
    %26 = arith.addf %22, %25 : vector<8x8xf32>
    %cst_21 = arith.constant 0.000000e+00 : f32
    %27 = vector.broadcast %cst_21 : f32 to vector<8x8xf32>
    %28 = arith.maximumf %26, %27 : vector<8x8xf32>
    %29 = arith.truncf %28 : vector<8x8xf32> to vector<8x8xbf16>
    %c1_22 = arith.constant 1 : index
    %c0_23 = arith.constant 0 : index
    %c0_24 = arith.constant 0 : index
    %30 = vector.load %arg4[%c1_22, %c0_23, %c0_24] : memref<3x8x128xbf16, #tpu.memory_space<vmem>>, vector<1x8x128xbf16>
    %31 = vector.shape_cast %30 : vector<1x8x128xbf16> to vector<8x128xbf16>
    %cst_25 = arith.constant dense<0.000000e+00> : vector<8x128xf32>
    %32 = tpu.matmul %29, %31, %cst_25 {dimension_numbers = #tpu.dot_dimension_numbers<[1], [0], [0], [1], [0, 0, 1, 1], [], []>} : vector<8x8xbf16>, vector<8x128xbf16>, vector<8x128xf32> -> vector<8x128xf32>
    %c1_26 = arith.constant 1 : index
    %c0_27 = arith.constant 0 : index
    %c0_28 = arith.constant 0 : index
    %33 = vector.load %arg5[%c1_26, %c0_27, %c0_28] : memref<3x1x128xf32, #tpu.memory_space<vmem>>, vector<1x1x128xf32>
    %34 = vector.shape_cast %33 : vector<1x1x128xf32> to vector<1x128xf32>
    %35 = vector.broadcast %34 : vector<1x128xf32> to vector<8x128xf32>
    %36 = arith.addf %32, %35 : vector<8x128xf32>
    %37 = arith.truncf %36 : vector<8x128xf32> to vector<8x128xbf16>
    %c2 = arith.constant 2 : index
    %c0_29 = arith.constant 0 : index
    %c0_30 = arith.constant 0 : index
    %38 = vector.load %arg2[%c2, %c0_29, %c0_30] : memref<3x128x8xbf16, #tpu.memory_space<vmem>>, vector<1x128x8xbf16>
    %39 = vector.shape_cast %38 : vector<1x128x8xbf16> to vector<128x8xbf16>
    %cst_31 = arith.constant dense<0.000000e+00> : vector<8x8xf32>
    %40 = tpu.matmul %37, %39, %cst_31 {dimension_numbers = #tpu.dot_dimension_numbers<[1], [0], [0], [1], [0, 0, 1, 1], [], []>} : vector<8x128xbf16>, vector<128x8xbf16>, vector<8x8xf32> -> vector<8x8xf32>
    %c2_32 = arith.constant 2 : index
    %c0_33 = arith.constant 0 : index
    %c0_34 = arith.constant 0 : index
    %41 = vector.load %arg3[%c2_32, %c0_33, %c0_34] : memref<3x1x8xf32, #tpu.memory_space<vmem>>, vector<1x1x8xf32>
    %42 = vector.shape_cast %41 : vector<1x1x8xf32> to vector<1x8xf32>
    %43 = vector.broadcast %42 : vector<1x8xf32> to vector<8x8xf32>
    %44 = arith.addf %40, %43 : vector<8x8xf32>
    %cst_35 = arith.constant 0.000000e+00 : f32
    %45 = vector.broadcast %cst_35 : f32 to vector<8x8xf32>
    %46 = arith.maximumf %44, %45 : vector<8x8xf32>
    %47 = arith.truncf %46 : vector<8x8xf32> to vector<8x8xbf16>
    %c2_36 = arith.constant 2 : index
    %c0_37 = arith.constant 0 : index
    %c0_38 = arith.constant 0 : index
    %48 = vector.load %arg4[%c2_36, %c0_37, %c0_38] : memref<3x8x128xbf16, #tpu.memory_space<vmem>>, vector<1x8x128xbf16>
    %49 = vector.shape_cast %48 : vector<1x8x128xbf16> to vector<8x128xbf16>
    %cst_39 = arith.constant dense<0.000000e+00> : vector<8x128xf32>
    %50 = tpu.matmul %47, %49, %cst_39 {dimension_numbers = #tpu.dot_dimension_numbers<[1], [0], [0], [1], [0, 0, 1, 1], [], []>} : vector<8x8xbf16>, vector<8x128xbf16>, vector<8x128xf32> -> vector<8x128xf32>
    %c2_40 = arith.constant 2 : index
    %c0_41 = arith.constant 0 : index
    %c0_42 = arith.constant 0 : index
    %51 = vector.load %arg5[%c2_40, %c0_41, %c0_42] : memref<3x1x128xf32, #tpu.memory_space<vmem>>, vector<1x1x128xf32>
    %52 = vector.shape_cast %51 : vector<1x1x128xf32> to vector<1x128xf32>
    %53 = vector.broadcast %52 : vector<1x128xf32> to vector<8x128xf32>
    %54 = arith.addf %50, %53 : vector<8x128xf32>
    %c0_43 = arith.constant 0 : index
    %c0_44 = arith.constant 0 : index
    %55 = vector.load %arg6[%c0_43, %c0_44] : memref<8x128xf32, #tpu.memory_space<vmem>>, vector<8x128xf32>
    tpu.vector_store %arg6[%c0_43, %c0_44], %54 {strides = array<i32>} : memref<8x128xf32, #tpu.memory_space<vmem>>, vector<8x128xf32>,
    return
  }
  func.func @transform_0(%arg0: i32) -> (i32, i32) {
    %c0_i32 = arith.constant 0 : i32
    %c0_i32_0 = arith.constant 0 : i32
    return %arg0, %c0_i32 : i32, i32
  }
  func.func @transform_1(%arg0: i32) -> (i32, i32, i32) {
    %c0_i32 = arith.constant 0 : i32
    %c0_i32_0 = arith.constant 0 : i32
    %c0_i32_1 = arith.constant 0 : i32
    %c0_i32_2 = arith.constant 0 : i32
    return %c0_i32, %c0_i32_0, %c0_i32_1 : i32, i32, i32
  }
  func.func @transform_2(%arg0: i32) -> (i32, i32, i32) {
    %c0_i32 = arith.constant 0 : i32
    %c0_i32_0 = arith.constant 0 : i32
    %c0_i32_1 = arith.constant 0 : i32
    %c0_i32_2 = arith.constant 0 : i32
    return %c0_i32, %c0_i32_0, %c0_i32_1 : i32, i32, i32
  }
  func.func @transform_3(%arg0: i32) -> (i32, i32, i32) {
    %c0_i32 = arith.constant 0 : i32
    %c0_i32_0 = arith.constant 0 : i32
    %c0_i32_1 = arith.constant 0 : i32
    %c0_i32_2 = arith.constant 0 : i32
    return %c0_i32, %c0_i32_0, %c0_i32_1 : i32, i32, i32
  }
  func.func @transform_4(%arg0: i32) -> (i32, i32, i32) {
    %c0_i32 = arith.constant 0 : i32
    %c0_i32_0 = arith.constant 0 : i32
    %c0_i32_1 = arith.constant 0 : i32
    %c0_i32_2 = arith.constant 0 : i32
    return %c0_i32, %c0_i32_0, %c0_i32_1 : i32, i32, i32
  }
  func.func @transform_5(%arg0: i32) -> (i32, i32) {
    %c0_i32 = arith.constant 0 : i32
    %c0_i32_0 = arith.constant 0 : i32
    return %arg0, %c0_i32 : i32, i32
  }
}

</mosaic_0001>

<llo_original>
// kernel: tpu_custom_call.1
$region0: #{tpu_custom_call.1}
  #allocation0 [shape = 'u32[]', space=smem, size = 0x4, offset = 0x4, fixed_abs, tag = 'smem constant byte address 0x4 - core index']
  #allocation1 [shape = 'u32[144,128]{1,0:T(1,128)}', space=vmem, size = 0x12000, scoped, tag = 'internal scratch']
  %s0 = inlined_call_operand.vmem [shape: f32[8,128], index: 0, kind: input, shape index: {}]
  %s1 = inlined_call_operand.vmem [shape: bf16[3,128,8], index: 1, kind: input, shape index: {}]
  %s2 = inlined_call_operand.vmem [shape: f32[3,1,8], index: 2, kind: input, shape index: {}]
  %s3 = inlined_call_operand.vmem [shape: bf16[3,8,128], index: 3, kind: input, shape index: {}]
  %s4 = inlined_call_operand.vmem [shape: f32[3,1,128], index: 4, kind: input, shape index: {}]
  %s5 = inlined_call_operand.hbm [shape: f32[8,128], index: 5, kind: output, shape index: {}]
  %s6 = sld [smem:[#allocation0]]
  $region30: #{tpu_custom_call.1} parent=0
    _
  %s8 = ssub.s32 1, %s6
  %s9 = scalar_select 0, %s8, %s6
  $region1: #{tpu_custom_call.1} parent=0
    #allocation2 [shape = 'u8[4096]{0}', space=vmem, size = 0x1000, scoped, tag = 'output window, operand 0, single buffered']
    #allocation3 [shape = 's32[1]{0}', space=sflag, size = 0x4, scoped, tag = 'scoped memory for tpu_custom_call.1']
    %10 = vsyncpa [#allocation3], 0
    // Predicated region
    $region2: #{tpu_custom_call.1} parent=1 // pred_check
      _
    $region3: #{tpu_custom_call.1} parent=1 // pred_check_branch
      %12 = sbr.rel (0) target = $region5
    $region4: #{tpu_custom_call.1} parent=1 // pred_region
      _
    $region5: #{tpu_custom_call.1} parent=1 // pred_fallthru
      _
    // Predicated region
    $region6: #{tpu_custom_call.1} parent=1 // pred_check
      _
    $region7: #{tpu_custom_call.1} parent=1 // pred_check_branch
      %14 = sbr.rel (0) target = $region9
    $region8: #{tpu_custom_call.1} parent=1 // pred_region
      _
    $region9: #{tpu_custom_call.1} parent=1 // pred_fallthru
      _
    // Predicated region
    $region10: #{tpu_custom_call.1} parent=1 // pred_check
      _
    $region11: #{tpu_custom_call.1} parent=1 // pred_check_branch
      %16 = sbr.rel (0) target = $region13
    $region12: #{tpu_custom_call.1} parent=1 // pred_region
      _
    $region13: #{tpu_custom_call.1} parent=1 // pred_fallthru
      _
    // Predicated region
    $region14: #{tpu_custom_call.1} parent=1 // pred_check
      _
    $region15: #{tpu_custom_call.1} parent=1 // pred_check_branch
      %18 = sbr.rel (0) target = $region17
    $region16: #{tpu_custom_call.1} parent=1 // pred_region
      _
    $region17: #{tpu_custom_call.1} parent=1 // pred_fallthru
      _
    // Predicated region
    $region18: #{tpu_custom_call.1} parent=1 // pred_check
      _
    $region19: #{tpu_custom_call.1} parent=1 // pred_check_branch
      %20 = sbr.rel (0) target = $region21
    $region20: #{tpu_custom_call.1} parent=1 // pred_region
      _
    $region21: #{tpu_custom_call.1} parent=1 // pred_fallthru
      _
    %v22 = vld [vmem:[%s0] sm:$0xff]
    %v23 = vpack.c.bf16 %v22, %v22
    %v24 = vld [vmem:[%s1] sm:$0xf]
    %v25 = vld [vmem:[%s1 + $0x4] sm:$0xf]
    %v26 = vld [vmem:[%s1 + $0x8] sm:$0xf]
    %v27 = vld [vmem:[%s1 + $0xc] sm:$0xf]
    %v28 = vld [vmem:[%s1 + $0x10] sm:$0xf]
    %v29 = vld [vmem:[%s1 + $0x14] sm:$0xf]
    %v30 = vld [vmem:[%s1 + $0x18] sm:$0xf]
    %v31 = vld [vmem:[%s1 + $0x1c] sm:$0xf]
    %v32 = vld [vmem:[%s1 + $0x20] sm:$0xf]
    %v33 = vld [vmem:[%s1 + $0x24] sm:$0xf]
    %v34 = vld [vmem:[%s1 + $0x28] sm:$0xf]
    %v35 = vld [vmem:[%s1 + $0x2c] sm:$0xf]
    %v36 = vld [vmem:[%s1 + $0x30] sm:$0xf]
    %v37 = vld [vmem:[%s1 + $0x34] sm:$0xf]
    %v38 = vld [vmem:[%s1 + $0x38] sm:$0xf]
    %v39 = vld [vmem:[%s1 + $0x3c] sm:$0xf]
    %v40 = vld [vmem:[%s2] sm:$0x1]
    %v42 = vlaneseq
    %v43 = vshrl.u32 %v42, 7
    %v44 = vsub.s32 0, %v43
    %v45 = vrot.slane %v40, %v44
    %v63 = vunpack.c.l.b16 %v24
    %v64 = vunpack.c.l.b16 %v25
    %v65 = vunpack.c.l.b16 %v26
    %v66 = vunpack.c.l.b16 %v27
    %v67 = vunpack.c.l.b16 %v28
    %v68 = vunpack.c.l.b16 %v29
    %v69 = vunpack.c.l.b16 %v30
    %v70 = vunpack.c.l.b16 %v31
    %v71 = vunpack.c.l.b16 %v32
    %v72 = vunpack.c.l.b16 %v33
    %v73 = vunpack.c.l.b16 %v34
    %v74 = vunpack.c.l.b16 %v35
    %v75 = vunpack.c.l.b16 %v36
    %v76 = vunpack.c.l.b16 %v37
    %v77 = vunpack.c.l.b16 %v38
    %v78 = vunpack.c.l.b16 %v39
    %v79 = vpack.c.b16 %v64, %v63
    %v80 = vpack.c.b16 %v66, %v65
    %v81 = vpack.c.b16 %v68, %v67
    %v82 = vpack.c.b16 %v70, %v69
    %v83 = vpack.c.b16 %v72, %v71
    %v84 = vpack.c.b16 %v74, %v73
    %v85 = vpack.c.b16 %v76, %v75
    %v86 = vpack.c.b16 %v78, %v77
    %95 = vmatprep.subr.bf16.mxu0 0
    %96 = vmatpush1.bf16.msra.mxu0 %v86
    %97 = vmatprep.subr.bf16.mxu0 0
    %98 = vmatpush1.bf16.msra.mxu0 %v85
    %99 = vmatprep.subr.bf16.mxu0 0
    %100 = vmatpush1.bf16.msra.mxu0 %v84
    %101 = vmatprep.subr.bf16.mxu0 0
    %102 = vmatpush1.bf16.msra.mxu0 %v83
    %103 = vmatprep.subr.bf16.mxu0 0
    %104 = vmatpush1.bf16.msra.mxu0 %v82
    %105 = vmatprep.subr.bf16.mxu0 0
    %106 = vmatpush1.bf16.msra.mxu0 %v81
    %107 = vmatprep.subr.bf16.mxu0 0
    %108 = vmatpush1.bf16.msra.mxu0 %v80
    %109 = vmatprep.subr.bf16.mxu0 0
    %110 = vmatpush1.bf16.msra.mxu0 %v79
    %111 = vmatprep.subr.bf16.mxu0 0
    %112 = vmatpush2.bf16.msra.mxu0 0
    %113 = vmatprep.subr.bf16.mxu0 0
    %114 = vmatpush2.bf16.msra.mxu0 0
    %115 = vmatprep.subr.bf16.mxu0 0
    %116 = vmatpush2.bf16.msra.mxu0 0
    %117 = vmatprep.subr.bf16.mxu0 0
    %118 = vmatpush2.bf16.msra.mxu0 0
    %119 = vmatprep.subr.bf16.mxu0 0
    %120 = vmatpush2.bf16.msra.mxu0 0
    %121 = vmatprep.subr.bf16.mxu0 0
    %122 = vmatpush2.bf16.msra.mxu0 0
    %123 = vmatprep.subr.bf16.mxu0 0
    %124 = vmatpush2.bf16.msra.mxu0 0
    %125 = vmatprep.subr.bf16.mxu0 0
    %126 = vmatpush2.bf16.msra.mxu0 0
    %127 = vmatprep.mubr.bf16.mxu0 0
    %128 = vmatmul.mubr.bf16.gmra.mxu0 %v23
    %v129 = vpop.f32.mrf.mxu0
    %v130 = vadd.f32 %v45, %v129
    %v131 = vpop.f32.mrf.mxu0
    %v132 = vpop.f32.mrf.mxu0
    %v133 = vpop.f32.mrf.mxu0
    %134 = vdwg.mxu0
    %v135 = vmax.f32 %v130, 0.0
    %v136 = vpack.c.bf16 %v135, %v135
    %v137 = vld [vmem:[%s3] sm:$0xf]
    %v138 = vld [vmem:[%s4] sm:$0x1]
    %v140 = vlaneseq
    %v141 = vshrl.u32 %v140, 7
    %v142 = vsub.s32 0, %v141
    %v143 = vrot.slane %v138, %v142
    %vm145 = vcmask 64512
    %v147 = vsel %vm145, %v136, 0
    %vm149 = vcmask 1043456
    %v151 = vsel %vm149, %v137, 0
    %153 = vmatprep.subr.bf16.mxu0 0
    %154 = vmatpush1.bf16.msra.mxu0 0
    %155 = vmatprep.subr.bf16.mxu0 0
    %156 = vmatpush1.bf16.msra.mxu0 0
    %157 = vmatprep.subr.bf16.mxu0 0
    %158 = vmatpush1.bf16.msra.mxu0 0
    %159 = vmatprep.subr.bf16.mxu0 0
    %160 = vmatpush1.bf16.msra.mxu0 0
    %161 = vmatprep.subr.bf16.mxu0 0
    %162 = vmatpush1.bf16.msra.mxu0 0
    %163 = vmatprep.subr.bf16.mxu0 0
    %164 = vmatpush1.bf16.msra.mxu0 0
    %165 = vmatprep.subr.bf16.mxu0 0
    %166 = vmatpush1.bf16.msra.mxu0 0
    %167 = vmatprep.subr.bf16.mxu0 0
    %168 = vmatpush1.bf16.msra.mxu0 %v151
    %169 = vmatprep.subr.bf16.mxu0 0
    %170 = vmatpush2.bf16.msra.mxu0 0
    %171 = vmatprep.subr.bf16.mxu0 0
    %172 = vmatpush2.bf16.msra.mxu0 0
    %173 = vmatprep.subr.bf16.mxu0 0
    %174 = vmatpush2.bf16.msra.mxu0 0
    %175 = vmatprep.subr.bf16.mxu0 0
    %176 = vmatpush2.bf16.msra.mxu0 0
    %177 = vmatprep.subr.bf16.mxu0 0
    %178 = vmatpush2.bf16.msra.mxu0 0
    %179 = vmatprep.subr.bf16.mxu0 0
    %180 = vmatpush2.bf16.msra.mxu0 0
    %181 = vmatprep.subr.bf16.mxu0 0
    %182 = vmatpush2.bf16.msra.mxu0 0
    %183 = vmatprep.subr.bf16.mxu0 0
    %184 = vmatpush2.bf16.msra.mxu0 0
    %185 = vmatprep.mubr.bf16.mxu0 0
    %186 = vmatmul.mubr.bf16.gmra.mxu0 %v147
    %v187 = vpop.f32.mrf.mxu0
    %v188 = vadd.f32 %v143, %v187
    %v189 = vpop.f32.mrf.mxu0
    %v190 = vpop.f32.mrf.mxu0
    %v191 = vpop.f32.mrf.mxu0
    %192 = vdwg.mxu0
    %v193 = vpack.c.bf16 %v188, %v188
    %s194 = scalar_lea.vmem %s1, 64
    %v195 = vld [vmem:[%s194] sm:$0xf]
    %v196 = vld [vmem:[%s194 + $0x4] sm:$0xf]
    %v197 = vld [vmem:[%s194 + $0x8] sm:$0xf]
    %v198 = vld [vmem:[%s194 + $0xc] sm:$0xf]
    %v199 = vld [vmem:[%s194 + $0x10] sm:$0xf]
    %v200 = vld [vmem:[%s194 + $0x14] sm:$0xf]
    %v201 = vld [vmem:[%s194 + $0x18] sm:$0xf]
    %v202 = vld [vmem:[%s194 + $0x1c] sm:$0xf]
    %v203 = vld [vmem:[%s194 + $0x20] sm:$0xf]
    %v204 = vld [vmem:[%s194 + $0x24] sm:$0xf]
    %v205 = vld [vmem:[%s194 + $0x28] sm:$0xf]
    %v206 = vld [vmem:[%s194 + $0x2c] sm:$0xf]
    %v207 = vld [vmem:[%s194 + $0x30] sm:$0xf]
    %v208 = vld [vmem:[%s194 + $0x34] sm:$0xf]
    %v209 = vld [vmem:[%s194 + $0x38] sm:$0xf]
    %v210 = vld [vmem:[%s194 + $0x3c] sm:$0xf]
    %s211 = scalar_lea.vmem %s2, 1
    %v212 = vld [vmem:[%s211] sm:$0x1]
    %v214 = vlaneseq
    %v215 = vshrl.u32 %v214, 7
    %v216 = vsub.s32 0, %v215
    %v217 = vrot.slane %v212, %v216
    %v235 = vunpack.c.l.b16 %v195
    %v236 = vunpack.c.l.b16 %v196
    %v237 = vunpack.c.l.b16 %v197
    %v238 = vunpack.c.l.b16 %v198
    %v239 = vunpack.c.l.b16 %v199
    %v240 = vunpack.c.l.b16 %v200
    %v241 = vunpack.c.l.b16 %v201
    %v242 = vunpack.c.l.b16 %v202
    %v243 = vunpack.c.l.b16 %v203
    %v244 = vunpack.c.l.b16 %v204
    %v245 = vunpack.c.l.b16 %v205
    %v246 = vunpack.c.l.b16 %v206
    %v247 = vunpack.c.l.b16 %v207
    %v248 = vunpack.c.l.b16 %v208
    %v249 = vunpack.c.l.b16 %v209
    %v250 = vunpack.c.l.b16 %v210
    %v251 = vpack.c.b16 %v236, %v235
    %v252 = vpack.c.b16 %v238, %v237
    %v253 = vpack.c.b16 %v240, %v239
    %v254 = vpack.c.b16 %v242, %v241
    %v255 = vpack.c.b16 %v244, %v243
    %v256 = vpack.c.b16 %v246, %v245
    %v257 = vpack.c.b16 %v248, %v247
    %v258 = vpack.c.b16 %v250, %v249
    %267 = vmatprep.subr.bf16.mxu0 0
    %268 = vmatpush1.bf16.msra.mxu0 %v258
    %269 = vmatprep.subr.bf16.mxu0 0
    %270 = vmatpush1.bf16.msra.mxu0 %v257
    %271 = vmatprep.subr.bf16.mxu0 0
    %272 = vmatpush1.bf16.msra.mxu0 %v256
    %273 = vmatprep.subr.bf16.mxu0 0
    %274 = vmatpush1.bf16.msra.mxu0 %v255
    %275 = vmatprep.subr.bf16.mxu0 0
    %276 = vmatpush1.bf16.msra.mxu0 %v254
    %277 = vmatprep.subr.bf16.mxu0 0
    %278 = vmatpush1.bf16.msra.mxu0 %v253
    %279 = vmatprep.subr.bf16.mxu0 0
    %280 = vmatpush1.bf16.msra.mxu0 %v252
    %281 = vmatprep.subr.bf16.mxu0 0
    %282 = vmatpush1.bf16.msra.mxu0 %v251
    %283 = vmatprep.subr.bf16.mxu0 0
    %284 = vmatpush2.bf16.msra.mxu0 0
    %285 = vmatprep.subr.bf16.mxu0 0
    %286 = vmatpush2.bf16.msra.mxu0 0
    %287 = vmatprep.subr.bf16.mxu0 0
    %288 = vmatpush2.bf16.msra.mxu0 0
    %289 = vmatprep.subr.bf16.mxu0 0
    %290 = vmatpush2.bf16.msra.mxu0 0
    %291 = vmatprep.subr.bf16.mxu0 0
    %292 = vmatpush2.bf16.msra.mxu0 0
    %293 = vmatprep.subr.bf16.mxu0 0
    %294 = vmatpush2.bf16.msra.mxu0 0
    %295 = vmatprep.subr.bf16.mxu0 0
    %296 = vmatpush2.bf16.msra.mxu0 0
    %297 = vmatprep.subr.bf16.mxu0 0
    %298 = vmatpush2.bf16.msra.mxu0 0
    %299 = vmatprep.mubr.bf16.mxu0 0
    %300 = vmatmul.mubr.bf16.gmra.mxu0 %v193
    %v301 = vpop.f32.mrf.mxu0
    %v302 = vadd.f32 %v217, %v301
    %v303 = vpop.f32.mrf.mxu0
    %v304 = vpop.f32.mrf.mxu0
    %v305 = vpop.f32.mrf.mxu0
    %306 = vdwg.mxu0
    %v307 = vmax.f32 %v302, 0.0
    %v308 = vpack.c.bf16 %v307, %v307
    %s309 = scalar_lea.vmem %s3, 4
    %v310 = vld [vmem:[%s309] sm:$0xf]
    %s311 = scalar_lea.vmem %s4, 1
    %v312 = vld [vmem:[%s311] sm:$0x1]
    %v314 = vlaneseq
    %v315 = vshrl.u32 %v314, 7
    %v316 = vsub.s32 0, %v315
    %v317 = vrot.slane %v312, %v316
    %v320 = vsel %vm145, %v308, 0
    %v323 = vsel %vm149, %v310, 0
    %325 = vmatprep.subr.bf16.mxu0 0
    %326 = vmatpush1.bf16.msra.mxu0 0
    %327 = vmatprep.subr.bf16.mxu0 0
    %328 = vmatpush1.bf16.msra.mxu0 0
    %329 = vmatprep.subr.bf16.mxu0 0
    %330 = vmatpush1.bf16.msra.mxu0 0
    %331 = vmatprep.subr.bf16.mxu0 0
    %332 = vmatpush1.bf16.msra.mxu0 0
    %333 = vmatprep.subr.bf16.mxu0 0
    %334 = vmatpush1.bf16.msra.mxu0 0
    %335 = vmatprep.subr.bf16.mxu0 0
    %336 = vmatpush1.bf16.msra.mxu0 0
    %337 = vmatprep.subr.bf16.mxu0 0
    %338 = vmatpush1.bf16.msra.mxu0 0
    %339 = vmatprep.subr.bf16.mxu0 0
    %340 = vmatpush1.bf16.msra.mxu0 %v323
    %341 = vmatprep.subr.bf16.mxu0 0
    %342 = vmatpush2.bf16.msra.mxu0 0
    %343 = vmatprep.subr.bf16.mxu0 0
    %344 = vmatpush2.bf16.msra.mxu0 0
    %345 = vmatprep.subr.bf16.mxu0 0
    %346 = vmatpush2.bf16.msra.mxu0 0
    %347 = vmatprep.subr.bf16.mxu0 0
    %348 = vmatpush2.bf16.msra.mxu0 0
    %349 = vmatprep.subr.bf16.mxu0 0
    %350 = vmatpush2.bf16.msra.mxu0 0
    %351 = vmatprep.subr.bf16.mxu0 0
    %352 = vmatpush2.bf16.msra.mxu0 0
    %353 = vmatprep.subr.bf16.mxu0 0
    %354 = vmatpush2.bf16.msra.mxu0 0
    %355 = vmatprep.subr.bf16.mxu0 0
    %356 = vmatpush2.bf16.msra.mxu0 0
    %357 = vmatprep.mubr.bf16.mxu0 0
    %358 = vmatmul.mubr.bf16.gmra.mxu0 %v320
    %v359 = vpop.f32.mrf.mxu0
    %v360 = vadd.f32 %v317, %v359
    %v361 = vpop.f32.mrf.mxu0
    %v362 = vpop.f32.mrf.mxu0
    %v363 = vpop.f32.mrf.mxu0
    %364 = vdwg.mxu0
    %v365 = vpack.c.bf16 %v360, %v360
    %s366 = scalar_lea.vmem %s1, 128
    %v367 = vld [vmem:[%s366] sm:$0xf]
    %v368 = vld [vmem:[%s366 + $0x4] sm:$0xf]
    %v369 = vld [vmem:[%s366 + $0x8] sm:$0xf]
    %v370 = vld [vmem:[%s366 + $0xc] sm:$0xf]
    %v371 = vld [vmem:[%s366 + $0x10] sm:$0xf]
    %v372 = vld [vmem:[%s366 + $0x14] sm:$0xf]
    %v373 = vld [vmem:[%s366 + $0x18] sm:$0xf]
    %v374 = vld [vmem:[%s366 + $0x1c] sm:$0xf]
    %v375 = vld [vmem:[%s366 + $0x20] sm:$0xf]
    %v376 = vld [vmem:[%s366 + $0x24] sm:$0xf]
    %v377 = vld [vmem:[%s366 + $0x28] sm:$0xf]
    %v378 = vld [vmem:[%s366 + $0x2c] sm:$0xf]
    %v379 = vld [vmem:[%s366 + $0x30] sm:$0xf]
    %v380 = vld [vmem:[%s366 + $0x34] sm:$0xf]
    %v381 = vld [vmem:[%s366 + $0x38] sm:$0xf]
    %v382 = vld [vmem:[%s366 + $0x3c] sm:$0xf]
    %s383 = scalar_lea.vmem %s2, 2
    %v384 = vld [vmem:[%s383] sm:$0x1]
    %v386 = vlaneseq
    %v387 = vshrl.u32 %v386, 7
    %v388 = vsub.s32 0, %v387
    %v389 = vrot.slane %v384, %v388
    %v407 = vunpack.c.l.b16 %v367
    %v408 = vunpack.c.l.b16 %v368
    %v409 = vunpack.c.l.b16 %v369
    %v410 = vunpack.c.l.b16 %v370
    %v411 = vunpack.c.l.b16 %v371
    %v412 = vunpack.c.l.b16 %v372
    %v413 = vunpack.c.l.b16 %v373
    %v414 = vunpack.c.l.b16 %v374
    %v415 = vunpack.c.l.b16 %v375
    %v416 = vunpack.c.l.b16 %v376
    %v417 = vunpack.c.l.b16 %v377
    %v418 = vunpack.c.l.b16 %v378
    %v419 = vunpack.c.l.b16 %v379
    %v420 = vunpack.c.l.b16 %v380
    %v421 = vunpack.c.l.b16 %v381
    %v422 = vunpack.c.l.b16 %v382
    %v423 = vpack.c.b16 %v408, %v407
    %v424 = vpack.c.b16 %v410, %v409
    %v425 = vpack.c.b16 %v412, %v411
    %v426 = vpack.c.b16 %v414, %v413
    %v427 = vpack.c.b16 %v416, %v415
    %v428 = vpack.c.b16 %v418, %v417
    %v429 = vpack.c.b16 %v420, %v419
    %v430 = vpack.c.b16 %v422, %v421
    %439 = vmatprep.subr.bf16.mxu0 0
    %440 = vmatpush1.bf16.msra.mxu0 %v430
    %441 = vmatprep.subr.bf16.mxu0 0
    %442 = vmatpush1.bf16.msra.mxu0 %v429
    %443 = vmatprep.subr.bf16.mxu0 0
    %444 = vmatpush1.bf16.msra.mxu0 %v428
    %445 = vmatprep.subr.bf16.mxu0 0
    %446 = vmatpush1.bf16.msra.mxu0 %v427
    %447 = vmatprep.subr.bf16.mxu0 0
    %448 = vmatpush1.bf16.msra.mxu0 %v426
    %449 = vmatprep.subr.bf16.mxu0 0
    %450 = vmatpush1.bf16.msra.mxu0 %v425
    %451 = vmatprep.subr.bf16.mxu0 0
    %452 = vmatpush1.bf16.msra.mxu0 %v424
    %453 = vmatprep.subr.bf16.mxu0 0
    %454 = vmatpush1.bf16.msra.mxu0 %v423
    %455 = vmatprep.subr.bf16.mxu0 0
    %456 = vmatpush2.bf16.msra.mxu0 0
    %457 = vmatprep.subr.bf16.mxu0 0
    %458 = vmatpush2.bf16.msra.mxu0 0
    %459 = vmatprep.subr.bf16.mxu0 0
    %460 = vmatpush2.bf16.msra.mxu0 0
    %461 = vmatprep.subr.bf16.mxu0 0
    %462 = vmatpush2.bf16.msra.mxu0 0
    %463 = vmatprep.subr.bf16.mxu0 0
    %464 = vmatpush2.bf16.msra.mxu0 0
    %465 = vmatprep.subr.bf16.mxu0 0
    %466 = vmatpush2.bf16.msra.mxu0 0
    %467 = vmatprep.subr.bf16.mxu0 0
    %468 = vmatpush2.bf16.msra.mxu0 0
    %469 = vmatprep.subr.bf16.mxu0 0
    %470 = vmatpush2.bf16.msra.mxu0 0
    %471 = vmatprep.mubr.bf16.mxu0 0
    %472 = vmatmul.mubr.bf16.gmra.mxu0 %v365
    %v473 = vpop.f32.mrf.mxu0
    %v474 = vadd.f32 %v389, %v473
    %v475 = vpop.f32.mrf.mxu0
    %v476 = vpop.f32.mrf.mxu0
    %v477 = vpop.f32.mrf.mxu0
    %478 = vdwg.mxu0
    %v479 = vmax.f32 %v474, 0.0
    %v480 = vpack.c.bf16 %v479, %v479
    %s481 = scalar_lea.vmem %s3, 8
    %v482 = vld [vmem:[%s481] sm:$0xf]
    %s483 = scalar_lea.vmem %s4, 2
    %v484 = vld [vmem:[%s483] sm:$0x1]
    %v486 = vlaneseq
    %v487 = vshrl.u32 %v486, 7
    %v488 = vsub.s32 0, %v487
    %v489 = vrot.slane %v484, %v488
    %v492 = vsel %vm145, %v480, 0
    %v495 = vsel %vm149, %v482, 0
    %497 = vmatprep.subr.bf16.mxu0 0
    %498 = vmatpush1.bf16.msra.mxu0 0
    %499 = vmatprep.subr.bf16.mxu0 0
    %500 = vmatpush1.bf16.msra.mxu0 0
    %501 = vmatprep.subr.bf16.mxu0 0
    %502 = vmatpush1.bf16.msra.mxu0 0
    %503 = vmatprep.subr.bf16.mxu0 0
    %504 = vmatpush1.bf16.msra.mxu0 0
    %505 = vmatprep.subr.bf16.mxu0 0
    %506 = vmatpush1.bf16.msra.mxu0 0
    %507 = vmatprep.subr.bf16.mxu0 0
    %508 = vmatpush1.bf16.msra.mxu0 0
    %509 = vmatprep.subr.bf16.mxu0 0
    %510 = vmatpush1.bf16.msra.mxu0 0
    %511 = vmatprep.subr.bf16.mxu0 0
    %512 = vmatpush1.bf16.msra.mxu0 %v495
    %513 = vmatprep.subr.bf16.mxu0 0
    %514 = vmatpush2.bf16.msra.mxu0 0
    %515 = vmatprep.subr.bf16.mxu0 0
    %516 = vmatpush2.bf16.msra.mxu0 0
    %517 = vmatprep.subr.bf16.mxu0 0
    %518 = vmatpush2.bf16.msra.mxu0 0
    %519 = vmatprep.subr.bf16.mxu0 0
    %520 = vmatpush2.bf16.msra.mxu0 0
    %521 = vmatprep.subr.bf16.mxu0 0
    %522 = vmatpush2.bf16.msra.mxu0 0
    %523 = vmatprep.subr.bf16.mxu0 0
    %524 = vmatpush2.bf16.msra.mxu0 0
    %525 = vmatprep.subr.bf16.mxu0 0
    %526 = vmatpush2.bf16.msra.mxu0 0
    %527 = vmatprep.subr.bf16.mxu0 0
    %528 = vmatpush2.bf16.msra.mxu0 0
    %529 = vmatprep.mubr.bf16.mxu0 0
    %530 = vmatmul.mubr.bf16.gmra.mxu0 %v492
    %v531 = vpop.f32.mrf.mxu0
    %v532 = vadd.f32 %v489, %v531
    %v533 = vpop.f32.mrf.mxu0
    %v534 = vpop.f32.mrf.mxu0
    %v535 = vpop.f32.mrf.mxu0
    %536 = vdwg.mxu0
    %537 = vst [vmem:[#allocation2] sm:$0xff] %v532
    // Predicated region
    $region22: #{tpu_custom_call.1} parent=1 // pred_check
      _
    $region23: #{tpu_custom_call.1} parent=1 // pred_check_branch
      %539 = sbr.rel (0) target = $region25
    $region24: #{tpu_custom_call.1} parent=1 // pred_region
      %s541 = ssub.s32 128, 128
      %542 = vsyncadd [#allocation3], %s541
      %s544 = sshll.u32 [#allocation2], 4
      %s545 = int_to_ptr.vmem [resolvable:$true] %s544
      %547 = dma.vmem_to_hbm [thread:$0]  %s545, 128, %s5, [#allocation3]
    $region25: #{tpu_custom_call.1} parent=1 // pred_fallthru
      _
    // Predicated region
    $region26: #{tpu_custom_call.1} parent=1 // pred_check
      _
    $region27: #{tpu_custom_call.1} parent=1 // pred_check_branch
      %549 = sbr.rel (0) target = $region29
    $region28: #{tpu_custom_call.1} parent=1 // pred_region
      %550 = dma.done [#allocation3], 128
    $region29: #{tpu_custom_call.1} parent=1 // pred_fallthru
      _
    %551 = vsyncpa [#allocation3], 1

</llo_original>
